<compile_context>
chip_gen: v7x
topology: tpu7x:2x2x1
jax: 0.10.0
libtpu: 0.0.40
codegen_flags: <defaults>
</compile_context>

<pallas_src>
import functools

import jax
import jax.numpy as jnp
from jax import lax
from jax.experimental import pallas as pl
from jax.experimental.pallas import tpu as pltpu
import numpy as np


_MAX_BATCH_TILE = 8                      # cap on static in-kernel unroll over the batch tile
_VMEM_LIMIT_BYTES = 48 * 1024 * 1024     # <= v7x 64 MiB physical with headroom; > v5e/v6e defaults


def _dilated_block_kernel(x_ref, mask_ref, w_ref, o_ref, *, dilation, taps, mxu_dtype):
    # x_ref / mask_ref / o_ref: (Bt, C, L) blocks in the native (B, C, L) layout.
    # w_ref: (taps, C, C) fused weights W_k = Wp @ Wd[:,:,k] * 1/(1-p), cast to the MXU dtype.
    Bt, C, L = x_ref.shape
    d = dilation

    w_c = w_ref[taps // 2]                                   # centre tap weight
    if taps == 3:
        w_p = w_ref[0]
        w_n = w_ref[2]
        # Boundary masks: no `% L` needed (block spans exactly one sequence along lanes).
        # Computed once per grid step and shared across the batch tile; NOT hoisted across grid
        # steps because the batch axis is "parallel" (megacore-sharded on v7x), so a
        # pl.program_id(0)==0 init guard would never execute on the second TensorCore.
        pos = lax.broadcasted_iota(jnp.int32, (C, L), 1)
        prev_ok = (pos >= d).astype(jnp.float32)
        next_ok = (pos < L - d).astype(jnp.float32)

    for b in range(Bt):                                      # static unroll, Bt is small
        x = x_ref[b].astype(jnp.float32)                     # residual path (f32 VPU, v5e-safe)
        xm = x * mask_ref[b].astype(jnp.float32)             # dropout; 1/(1-p) folded into w

        # Centre tap (always present).
        y = jnp.dot(w_c, xm.astype(mxu_dtype), preferred_element_type=jnp.float32)
        if taps == 3:
            # x[t-d] / x[t+d] via XLU lane rotation (non-negative shifts) + boundary zeroing.
            # Three accumulating dots instead of a (3C, L) concat -> no extra VMEM slab traffic.
            x_prev = pltpu.roll(xm, shift=d, axis=1) * prev_ok          # x[t-d]
            x_next = pltpu.roll(xm, shift=L - d, axis=1) * next_ok      # x[t+d]
            y += jnp.dot(w_p, x_prev.astype(mxu_dtype), preferred_element_type=jnp.float32)
            y += jnp.dot(w_n, x_next.astype(mxu_dtype), preferred_element_type=jnp.float32)

        out = y + x                                          # residual uses the ORIGINAL input
        o_ref[b] = jnp.where(out >= 0, out, 0.2 * out).astype(o_ref.dtype)


def _pick_batch_tile(B, C, L, *, io_itemsize, vmem_budget_bytes=24 * 1024 * 1024):
    """Batch tile: fits VMEM (streams + intermediates), keeps >= 2 grid steps, divides B."""
    row = C * L
    # Double-buffered HBM<->VMEM streams per batch row: x + mask in, out.
    stream = 2 * row * (io_itemsize + 1) + 2 * row * io_itemsize
    # f32 intermediates inside the unrolled per-batch body (x, xm, x_prev, x_next, acc).
    interm = 5 * 4 * row
    per_row = stream + interm
    shared = 2 * 4 * row                                     # per-step boundary masks (f32 x2)
    bt = max(1, min(B, _MAX_BATCH_TILE,
                    max(1, (vmem_budget_bytes - shared) // max(per_row, 1))))
    # Keep >= 2 grid steps so dimension_semantics=("parallel",) can shard across v7x's two
    # TensorCores and the DMA pipeline has something to overlap with.
    while bt > 1 and -(-B // bt) < 2:
        bt -= 1
    # Uniform blocks only.
    while bt > 1 and B % bt != 0:
        bt -= 1
    return bt


def dilated_block(x, keep_mask, w_dilated, w_pointwise, *, dilation, p=0.1, batch_tile=None):
    """x: (B, C, L) (bf16 recommended for HBM-roofline); keep_mask: (B, C, L) 0/1;
    w_dilated: (C, C, 3) [out, in, k]; w_pointwise: (C, C, 1) [out, in, k]."""
    assert x.ndim == 3 and keep_mask.shape == x.shape
    assert dilation >= 1
    B, C, L = x.shape
    taps = 3 if dilation < L else 1                          # dilation >= L: outer taps see only padding

    # MXU dtype: bf16 when the activations are bf16 (native MXU rate), else stay f32.
    mxu_dtype = jnp.bfloat16 if x.dtype == jnp.bfloat16 else jnp.float32

    # --- weight fusion (tiny (C,C) matmuls, done once in plain JAX) ---
    # conv1x1(conv_dilated(dropout(x))) == sum_k (Wp @ Wd[:,:,k]) / (1-p) @ (x*keep)[t+(k-1)d]
    scale = 1.0 / (1.0 - p)
    wd = jnp.transpose(w_dilated, (2, 0, 1)).astype(jnp.float32)   # (3, C_out, C_in)
    wp = w_pointwise[:, :, 0].astype(jnp.float32)                  # (C_out, C_in)
    w_fused = jnp.einsum("om,kmi->koi", wp, wd) * scale            # (3, C, C)
    if taps == 1:
        w_fused = w_fused[1:2]                                     # centre slice only (1, C, C)
    w_fused = w_fused.astype(mxu_dtype)

    # Keep mask shipped as int8 (4x less mask traffic than f32); no layout shuffle.
    m = keep_mask if keep_mask.dtype == jnp.int8 else keep_mask.astype(jnp.int8)
    # TODO(synk): generate the keep mask in-kernel with pltpu.prng_seed/prng_random_bits to drop
    # the 1 B/elt of mask HBM reads entirely (loses bit-exact host reproducibility).
    # TODO(synk): when L is not a multiple of 128, pad L in the surrounding graph to avoid masked
    # vst.msk partial stores (blocks here are full-extent, so any L is still *correct*).

    io = jnp.dtype(x.dtype).itemsize
    Bt = batch_tile if batch_tile is not None else _pick_batch_tile(B, C, L, io_itemsize=io)
    assert B % Bt == 0, "batch_tile must divide the batch size"
    grid = (B // Bt,)

    kernel = functools.partial(_dilated_block_kernel,
                               dilation=dilation, taps=taps, mxu_dtype=mxu_dtype)
    cost = pl.CostEstimate(
        flops=2 * taps * C * C * B * L,
        transcendentals=0,
        bytes_accessed=B * C * L * (2 * io + 1) + taps * C * C * jnp.dtype(mxu_dtype).itemsize,
    )

    return pl.pallas_call(
        kernel,
        out_shape=jax.ShapeDtypeStruct((B, C, L), x.dtype),
        grid_spec=pltpu.PrefetchScalarGridSpec(
            num_scalar_prefetch=0,
            grid=grid,
            in_specs=[
                pl.BlockSpec((Bt, C, L), lambda i: (i, 0, 0)),      # x, native (B,C,L) layout
                pl.BlockSpec((Bt, C, L), lambda i: (i, 0, 0)),      # dropout keep mask (int8)
                pl.BlockSpec((taps, C, C), lambda i: (0, 0, 0)),    # fused conv weights
            ],
            out_specs=pl.BlockSpec((Bt, C, L), lambda i: (i, 0, 0)),
        ),
        compiler_params=pltpu.CompilerParams(
            dimension_semantics=("parallel",),
            vmem_limit_bytes=_VMEM_LIMIT_BYTES,
        ),
        cost_estimate=cost,
    )(x, m, w_fused)


def _reference(x, keep_mask, w_dilated, w_pointwise, *, dilation, p=0.1):
    """Pure-JAX f32 reference matching the PyTorch forward (with the same dropout mask)."""
    xd = x * keep_mask / (1.0 - p)
    y = lax.conv_general_dilated(
        xd, w_dilated, window_strides=(1,), padding=[(dilation, dilation)],
        rhs_dilation=(dilation,), dimension_numbers=("NCH", "OIH", "NCH"))
    z = lax.conv_general_dilated(
        y, w_pointwise, window_strides=(1,), padding=[(0, 0)],
        dimension_numbers=("NCH", "OIH", "NCH"))
    out = z + x
    return jnp.where(out >= 0, out, 0.2 * out)


if __name__ == "__main__":
    B, C, L = 4, 16, 128        # small; L multiple of 128 -> lane-dense, unmasked stores
    dilation = 2
    p = 0.1

    key = jax.random.PRNGKey(0)
    k_x, k_wd, k_wp, k_drop = jax.random.split(key, 4)

    x = jax.random.normal(k_x, (B, C, L), dtype=jnp.float32)
    # Deterministic stand-ins for the nn.Conv1d weights (no bias in the module).
    w_dilated = jax.random.normal(k_wd, (C, C, 3), dtype=jnp.float32) * (1.0 / np.sqrt(3 * C))
    w_pointwise = jax.random.normal(k_wp, (C, C, 1), dtype=jnp.float32) * (1.0 / np.sqrt(C))

    # F.dropout(p=0.1) is stochastic; a deterministic keep-mask is drawn host-side and applied
    # inside the kernel (inverted scaling folded into the fused weights).
    # TODO(synk): PyTorch's dropout RNG stream itself is not reproducible bit-for-bit.
    keep_mask = jax.random.bernoulli(k_drop, 1.0 - p, (B, C, L))

    # bf16 activations into the kernel (what a bf16 pipeline would feed), int8 keep mask.
    out = dilated_block(x.astype(jnp.bfloat16), keep_mask.astype(jnp.int8),
                        w_dilated, w_pointwise, dilation=dilation, p=p)
    out = jax.block_until_ready(out)

    ref = _reference(x, keep_mask.astype(jnp.float32), w_dilated, w_pointwise,
                     dilation=dilation, p=p)
    # Tolerance loosened vs. the f32 reference because activations/weights/output are bf16
    # (accumulation stays f32, so there is no systematic bias).
    np.testing.assert_allclose(np.asarray(out, dtype=np.float32), np.asarray(ref),
                               rtol=5e-2, atol=5e-2)

    print("KERNEL_OK")
</pallas_src>

<mosaic_0001>
module attributes {stable_mosaic.version = 11 : i64} {
  func.func @_dilated_block_kernel(%arg0: i32, %arg1: memref<2x16x128xbf16, #tpu.memory_space<vmem>>, %arg2: memref<2x16x128xi8, #tpu.memory_space<vmem>>, %arg3: memref<3x16x16xbf16, #tpu.memory_space<vmem>>, %arg4: memref<2x16x128xbf16, #tpu.memory_space<vmem>>) attributes {dimension_semantics = [#tpu.dimension_semantics<parallel>], iteration_bounds = array<i64: 2>, scalar_prefetch = 0 : i64, scratch_operands = 0 : i64, tpu.core_type = #tpu.core_type<tc>, window_params = [{transform_indices = @transform_0, window_bounds = array<i64: 2, 16, 128>}, {transform_indices = @transform_1, window_bounds = array<i64: 2, 16, 128>}, {pipeline_mode = #tpu.pipeline_mode<synchronous>, transform_indices = @transform_2, window_bounds = array<i64: 3, 16, 16>}, {transform_indices = @transform_3, window_bounds = array<i64: 2, 16, 128>}]} {
    %c1 = arith.constant 1 : index
    %c0 = arith.constant 0 : index
    %c0_0 = arith.constant 0 : index
    %0 = vector.load %arg3[%c1, %c0, %c0_0] : memref<3x16x16xbf16, #tpu.memory_space<vmem>>, vector<1x16x16xbf16>
    %1 = vector.shape_cast %0 : vector<1x16x16xbf16> to vector<16x16xbf16>
    %c0_1 = arith.constant 0 : index
    %c0_2 = arith.constant 0 : index
    %c0_3 = arith.constant 0 : index
    %2 = vector.load %arg3[%c0_1, %c0_2, %c0_3] : memref<3x16x16xbf16, #tpu.memory_space<vmem>>, vector<1x16x16xbf16>
    %3 = vector.shape_cast %2 : vector<1x16x16xbf16> to vector<16x16xbf16>
    %c2 = arith.constant 2 : index
    %c0_4 = arith.constant 0 : index
    %c0_5 = arith.constant 0 : index
    %4 = vector.load %arg3[%c2, %c0_4, %c0_5] : memref<3x16x16xbf16, #tpu.memory_space<vmem>>, vector<1x16x16xbf16>
    %5 = vector.shape_cast %4 : vector<1x16x16xbf16> to vector<16x16xbf16>
    %6 = tpu.iota {dimensions = array<i32: 1>} : vector<16x128xi32>
    %c2_i32 = arith.constant 2 : i32
    %7 = vector.broadcast %c2_i32 : i32 to vector<16x128xi32>
    %8 = arith.cmpi sge, %6, %7 : vector<16x128xi32>
    %9 = arith.extui %8 : vector<16x128xi1> to vector<16x128xi32>
    %10 = arith.sitofp %9 : vector<16x128xi32> to vector<16x128xf32>
    %c126_i32 = arith.constant 126 : i32
    %11 = vector.broadcast %c126_i32 : i32 to vector<16x128xi32>
    %12 = arith.cmpi slt, %6, %11 : vector<16x128xi32>
    %13 = arith.extui %12 : vector<16x128xi1> to vector<16x128xi32>
    %14 = arith.sitofp %13 : vector<16x128xi32> to vector<16x128xf32>
    %c0_6 = arith.constant 0 : index
    %c0_7 = arith.constant 0 : index
    %c0_8 = arith.constant 0 : index
    %15 = vector.load %arg1[%c0_6, %c0_7, %c0_8] : memref<2x16x128xbf16, #tpu.memory_space<vmem>>, vector<1x16x128xbf16>
    %16 = vector.shape_cast %15 : vector<1x16x128xbf16> to vector<16x128xbf16>
    %17 = arith.extf %16 : vector<16x128xbf16> to vector<16x128xf32>
    %c0_9 = arith.constant 0 : index
    %c0_10 = arith.constant 0 : index
    %c0_11 = arith.constant 0 : index
    %18 = vector.load %arg2[%c0_9, %c0_10, %c0_11] : memref<2x16x128xi8, #tpu.memory_space<vmem>>, vector<1x16x128xi8>
    %19 = vector.shape_cast %18 : vector<1x16x128xi8> to vector<16x128xi8>
    %20 = arith.sitofp %19 : vector<16x128xi8> to vector<16x128xf32>
    %21 = arith.mulf %17, %20 : vector<16x128xf32>
    %22 = arith.truncf %21 : vector<16x128xf32> to vector<16x128xbf16>
    %cst = arith.constant dense<0.000000e+00> : vector<16x128xf32>
    %23 = tpu.matmul %1, %22, %cst {dimension_numbers = #tpu.dot_dimension_numbers<[1], [0], [0], [1], [0, 0, 1, 1], [], []>} : vector<16x16xbf16>, vector<16x128xbf16>, vector<16x128xf32> -> vector<16x128xf32>
    %c2_i32_12 = arith.constant 2 : i32
    %24 = tpu.dynamic_rotate %21 by %c2_i32_12 dim 1 : vector<16x128xf32>, i32 -> vector<16x128xf32>
    %25 = arith.mulf %24, %10 : vector<16x128xf32>
    %c126_i32_13 = arith.constant 126 : i32
    %26 = tpu.dynamic_rotate %21 by %c126_i32_13 dim 1 : vector<16x128xf32>, i32 -> vector<16x128xf32>
    %27 = arith.mulf %26, %14 : vector<16x128xf32>
    %28 = arith.truncf %25 : vector<16x128xf32> to vector<16x128xbf16>
    %cst_14 = arith.constant dense<0.000000e+00> : vector<16x128xf32>
    %29 = tpu.matmul %3, %28, %cst_14 {dimension_numbers = #tpu.dot_dimension_numbers<[1], [0], [0], [1], [0, 0, 1, 1], [], []>} : vector<16x16xbf16>, vector<16x128xbf16>, vector<16x128xf32> -> vector<16x128xf32>
    %30 = arith.addf %23, %29 : vector<16x128xf32>
    %31 = arith.truncf %27 : vector<16x128xf32> to vector<16x128xbf16>
    %cst_15 = arith.constant dense<0.000000e+00> : vector<16x128xf32>
    %32 = tpu.matmul %5, %31, %cst_15 {dimension_numbers = #tpu.dot_dimension_numbers<[1], [0], [0], [1], [0, 0, 1, 1], [], []>} : vector<16x16xbf16>, vector<16x128xbf16>, vector<16x128xf32> -> vector<16x128xf32>
    %33 = arith.addf %30, %32 : vector<16x128xf32>
    %34 = arith.addf %33, %17 : vector<16x128xf32>
    %cst_16 = arith.constant 0.000000e+00 : f32
    %35 = vector.broadcast %cst_16 : f32 to vector<16x128xf32>
    %36 = arith.cmpf oge, %34, %35 : vector<16x128xf32>
    %cst_17 = arith.constant 2.000000e-01 : f32
    %37 = vector.broadcast %cst_17 : f32 to vector<16x128xf32>
    %38 = arith.mulf %37, %34 : vector<16x128xf32>
    %39 = arith.select %36, %34, %38 : vector<16x128xi1>, vector<16x128xf32>
    %40 = arith.truncf %39 : vector<16x128xf32> to vector<16x128xbf16>
    %c0_18 = arith.constant 0 : index
    %c0_19 = arith.constant 0 : index
    %c0_20 = arith.constant 0 : index
    %41 = vector.load %arg4[%c0_18, %c0_19, %c0_20] : memref<2x16x128xbf16, #tpu.memory_space<vmem>>, vector<1x16x128xbf16>
    %42 = vector.shape_cast %41 : vector<1x16x128xbf16> to vector<16x128xbf16>
    %43 = vector.shape_cast %40 : vector<16x128xbf16> to vector<1x16x128xbf16>
    tpu.vector_store %arg4[%c0_18, %c0_19, %c0_20], %43 {strides = array<i32>} : memref<2x16x128xbf16, #tpu.memory_space<vmem>>, vector<1x16x128xbf16>,
    %c1_21 = arith.constant 1 : index
    %c0_22 = arith.constant 0 : index
    %c0_23 = arith.constant 0 : index
    %44 = vector.load %arg1[%c1_21, %c0_22, %c0_23] : memref<2x16x128xbf16, #tpu.memory_space<vmem>>, vector<1x16x128xbf16>
    %45 = vector.shape_cast %44 : vector<1x16x128xbf16> to vector<16x128xbf16>
    %46 = arith.extf %45 : vector<16x128xbf16> to vector<16x128xf32>
    %c1_24 = arith.constant 1 : index
    %c0_25 = arith.constant 0 : index
    %c0_26 = arith.constant 0 : index
    %47 = vector.load %arg2[%c1_24, %c0_25, %c0_26] : memref<2x16x128xi8, #tpu.memory_space<vmem>>, vector<1x16x128xi8>
    %48 = vector.shape_cast %47 : vector<1x16x128xi8> to vector<16x128xi8>
    %49 = arith.sitofp %48 : vector<16x128xi8> to vector<16x128xf32>
    %50 = arith.mulf %46, %49 : vector<16x128xf32>
    %51 = arith.truncf %50 : vector<16x128xf32> to vector<16x128xbf16>
    %cst_27 = arith.constant dense<0.000000e+00> : vector<16x128xf32>
    %52 = tpu.matmul %1, %51, %cst_27 {dimension_numbers = #tpu.dot_dimension_numbers<[1], [0], [0], [1], [0, 0, 1, 1], [], []>} : vector<16x16xbf16>, vector<16x128xbf16>, vector<16x128xf32> -> vector<16x128xf32>
    %c2_i32_28 = arith.constant 2 : i32
    %53 = tpu.dynamic_rotate %50 by %c2_i32_28 dim 1 : vector<16x128xf32>, i32 -> vector<16x128xf32>
    %54 = arith.mulf %53, %10 : vector<16x128xf32>
    %c126_i32_29 = arith.constant 126 : i32
    %55 = tpu.dynamic_rotate %50 by %c126_i32_29 dim 1 : vector<16x128xf32>, i32 -> vector<16x128xf32>
    %56 = arith.mulf %55, %14 : vector<16x128xf32>
    %57 = arith.truncf %54 : vector<16x128xf32> to vector<16x128xbf16>
    %cst_30 = arith.constant dense<0.000000e+00> : vector<16x128xf32>
    %58 = tpu.matmul %3, %57, %cst_30 {dimension_numbers = #tpu.dot_dimension_numbers<[1], [0], [0], [1], [0, 0, 1, 1], [], []>} : vector<16x16xbf16>, vector<16x128xbf16>, vector<16x128xf32> -> vector<16x128xf32>
    %59 = arith.addf %52, %58 : vector<16x128xf32>
    %60 = arith.truncf %56 : vector<16x128xf32> to vector<16x128xbf16>
    %cst_31 = arith.constant dense<0.000000e+00> : vector<16x128xf32>
    %61 = tpu.matmul %5, %60, %cst_31 {dimension_numbers = #tpu.dot_dimension_numbers<[1], [0], [0], [1], [0, 0, 1, 1], [], []>} : vector<16x16xbf16>, vector<16x128xbf16>, vector<16x128xf32> -> vector<16x128xf32>
    %62 = arith.addf %59, %61 : vector<16x128xf32>
    %63 = arith.addf %62, %46 : vector<16x128xf32>
    %cst_32 = arith.constant 0.000000e+00 : f32
    %64 = vector.broadcast %cst_32 : f32 to vector<16x128xf32>
    %65 = arith.cmpf oge, %63, %64 : vector<16x128xf32>
    %cst_33 = arith.constant 2.000000e-01 : f32
    %66 = vector.broadcast %cst_33 : f32 to vector<16x128xf32>
    %67 = arith.mulf %66, %63 : vector<16x128xf32>
    %68 = arith.select %65, %63, %67 : vector<16x128xi1>, vector<16x128xf32>
    %69 = arith.truncf %68 : vector<16x128xf32> to vector<16x128xbf16>
    %c1_34 = arith.constant 1 : index
    %c0_35 = arith.constant 0 : index
    %c0_36 = arith.constant 0 : index
    %70 = vector.load %arg4[%c1_34, %c0_35, %c0_36] : memref<2x16x128xbf16, #tpu.memory_space<vmem>>, vector<1x16x128xbf16>
    %71 = vector.shape_cast %70 : vector<1x16x128xbf16> to vector<16x128xbf16>
    %72 = vector.shape_cast %69 : vector<16x128xbf16> to vector<1x16x128xbf16>
    tpu.vector_store %arg4[%c1_34, %c0_35, %c0_36], %72 {strides = array<i32>} : memref<2x16x128xbf16, #tpu.memory_space<vmem>>, vector<1x16x128xbf16>,
    return
  }
  func.func @transform_0(%arg0: i32) -> (i32, i32, i32) {
    %c0_i32 = arith.constant 0 : i32
    %c0_i32_0 = arith.constant 0 : i32
    %c0_i32_1 = arith.constant 0 : i32
    return %arg0, %c0_i32, %c0_i32_0 : i32, i32, i32
  }
  func.func @transform_1(%arg0: i32) -> (i32, i32, i32) {
    %c0_i32 = arith.constant 0 : i32
    %c0_i32_0 = arith.constant 0 : i32
    %c0_i32_1 = arith.constant 0 : i32
    return %arg0, %c0_i32, %c0_i32_0 : i32, i32, i32
  }
  func.func @transform_2(%arg0: i32) -> (i32, i32, i32) {
    %c0_i32 = arith.constant 0 : i32
    %c0_i32_0 = arith.constant 0 : i32
    %c0_i32_1 = arith.constant 0 : i32
    %c0_i32_2 = arith.constant 0 : i32
    return %c0_i32, %c0_i32_0, %c0_i32_1 : i32, i32, i32
  }
  func.func @transform_3(%arg0: i32) -> (i32, i32, i32) {
    %c0_i32 = arith.constant 0 : i32
    %c0_i32_0 = arith.constant 0 : i32
    %c0_i32_1 = arith.constant 0 : i32
    return %arg0, %c0_i32, %c0_i32_0 : i32, i32, i32
  }
}

</mosaic_0001>

<llo_original>
// kernel: tpu_custom_call.1
$region0: #{tpu_custom_call.1}
  #allocation0 [shape = 'u32[]', space=smem, size = 0x4, offset = 0x4, fixed_abs, tag = 'smem constant byte address 0x4 - core index']
  #allocation1 [shape = 'u32[144,128]{1,0:T(1,128)}', space=vmem, size = 0x12000, scoped, tag = 'internal scratch']
  %s0 = inlined_call_operand.hbm [shape: bf16[4,16,128], index: 0, kind: input, shape index: {}]
  %s1 = inlined_call_operand.hbm [shape: s8[4,16,128], index: 1, kind: input, shape index: {}]
  %s2 = inlined_call_operand.hbm [shape: bf16[3,16,16], index: 2, kind: input, shape index: {}]
  %s3 = inlined_call_operand.hbm [shape: bf16[4,16,128], index: 3, kind: output, shape index: {}]
  %s4 = sld [smem:[#allocation0]]
  $region57: #{tpu_custom_call.1} parent=0
    _
  %s6 = ssub.s32 1, %s4
  %s7 = scalar_select 0, %s6, %s4
  $region1: #{tpu_custom_call.1} parent=0
    #allocation2 [shape = 'u8[16384]{0}', space=vmem, size = 0x4000, scoped, tag = 'input window, operand 0']
    #allocation3 [shape = 's32[2]{0}', space=sflag, size = 0x8, scoped, tag = 'scoped memory for tpu_custom_call.1']
    #allocation4 [shape = 's32[2]{0}', space=sflag, size = 0x8, scoped, tag = 'scoped memory for tpu_custom_call.1']
    #allocation5 [shape = 'u8[8192]{0}', space=vmem, size = 0x2000, scoped, tag = 'input window, operand 1']
    #allocation6 [shape = 's32[2]{0}', space=sflag, size = 0x8, scoped, tag = 'scoped memory for tpu_custom_call.1']
    #allocation7 [shape = 'u8[12288]{0}', space=vmem, size = 0x3000, scoped, tag = 'input window, operand 2, single buffered']
    #allocation8 [shape = 'u8[16384]{0}', space=vmem, size = 0x4000, scoped, tag = 'output window, operand 0']
    %8 = vsyncpa [#allocation3], 0
    %s9 = scalar_lea.sflag [#allocation3], 1
    %10 = vsyncpa %s9, 0
    %11 = vsyncpa [#allocation6], 0
    %s12 = scalar_lea.sflag [#allocation6], 1
    %13 = vsyncpa %s12, 0
    %14 = vsyncpa [#allocation4], 0
    %s15 = scalar_lea.sflag [#allocation4], 1
    %16 = vsyncpa %s15, 0
    loop: start=0, step=1, limit=4
    $region2: #{tpu_custom_call.1} parent=1 // loop_pre_header
      _
    $region3: #{tpu_custom_call.1} parent=1 // loop_header
      %s18 = sphi 0, %s22
      %p19 = scmp.ge.s32.totalorder %s18, 4
      %s28 = sphi 0, %s30
      %s31 = sphi 0, %s28
      %s32 = sphi 0, %s31
      %s48 = sphi 0, %s32
      %s54 = sphi 0, %s56
      %s57 = sphi 0, %s54
      %s58 = sphi 0, %s57
      %s74 = sphi 0, %s58
      %s78 = sphi 0, %s78
      %s80 = sphi 0, %s78
      %s81 = sphi 0, %s80
      %s95 = sphi 0, %s81
      %s101 = sphi 0, %s103
      %s104 = sphi 0, %s101
      %s105 = sphi 0, %s104
      %s121 = sphi 0, %s105
    $region4: #{tpu_custom_call.1} parent=1 // loop_header_branch
      %21 = sbr.rel (%p19) target = $region8
    $region5: #{tpu_custom_call.1} parent=1 // loop_body
      %s23 = ssub.s32 %s18, 1
      %s24 = ssub.s32 %s18, 2
      %s25 = sadd.s32 %s18, 1
      %s26 = ssub.s32 %s18, %s25
      %p27 = scmp.eq.s32.totalorder %s26, 0
      %s29 = sadd.s32 %s28, 1
      %s30 = scalar_select %p27, %s28, %s29
      %p33 = pneg %p27
      %p34 = scmp.eq.s32.totalorder %s18, 1
      %p35 = por %p33, %p34
      %p36 = scmp.ne.s32.totalorder %s28, %s31
      %p37 = scmp.eq.s32.totalorder %s18, 0
      %p38 = por %p36, %p37
      %p39 = scmp.ne.s32.totalorder %s28, %s31
      %p40 = scmp.eq.s32.totalorder %s23, 1
      %p41 = por %p39, %p40
      %p42 = scmp.ne.s32.totalorder %s31, %s32
      %p43 = scmp.eq.s32.totalorder %s23, 0
      %p44 = por %p42, %p43
      %p45 = scmp.ne.s32.totalorder %s31, %s32
      %p46 = scmp.eq.s32.totalorder %s24, 1
      %p47 = por %p45, %p46
      %p49 = scmp.ne.s32.totalorder %s32, %s48
      %p50 = scmp.eq.s32.totalorder %s24, 0
      %p51 = por %p49, %p50
      %s52 = ssub.s32 %s18, %s25
      %p53 = scmp.eq.s32.totalorder %s52, 0
      %s55 = sadd.s32 %s54, 1
      %s56 = scalar_select %p53, %s54, %s55
      %p59 = pneg %p53
      %p60 = scmp.eq.s32.totalorder %s18, 1
      %p61 = por %p59, %p60
      %p62 = scmp.ne.s32.totalorder %s54, %s57
      %p63 = scmp.eq.s32.totalorder %s18, 0
      %p64 = por %p62, %p63
      %p65 = scmp.ne.s32.totalorder %s54, %s57
      %p66 = scmp.eq.s32.totalorder %s23, 1
      %p67 = por %p65, %p66
      %p68 = scmp.ne.s32.totalorder %s57, %s58
      %p69 = scmp.eq.s32.totalorder %s23, 0
      %p70 = por %p68, %p69
      %p71 = scmp.ne.s32.totalorder %s57, %s58
      %p72 = scmp.eq.s32.totalorder %s24, 1
      %p73 = por %p71, %p72
      %p75 = scmp.ne.s32.totalorder %s58, %s74
      %p76 = scmp.eq.s32.totalorder %s24, 0
      %p77 = por %p75, %p76
      %s79 = sadd.s32 %s78, 1
      %p82 = scmp.eq.s32.totalorder %s18, 1
      %p83 = scmp.ne.s32.totalorder %s78, %s80
      %p84 = scmp.eq.s32.totalorder %s18, 0
      %p85 = por %p83, %p84
      %p86 = scmp.ne.s32.totalorder %s78, %s80
      %p87 = scmp.eq.s32.totalorder %s23, 1
      %p88 = por %p86, %p87
      %p89 = scmp.ne.s32.totalorder %s80, %s81
      %p90 = scmp.eq.s32.totalorder %s23, 0
      %p91 = por %p89, %p90
      %p92 = scmp.ne.s32.totalorder %s80, %s81
      %p93 = scmp.eq.s32.totalorder %s24, 1
      %p94 = por %p92, %p93
      %p96 = scmp.ne.s32.totalorder %s81, %s95
      %p97 = scmp.eq.s32.totalorder %s24, 0
      %p98 = por %p96, %p97
      %s99 = ssub.s32 %s18, %s25
      %p100 = scmp.eq.s32.totalorder %s99, 0
      %s102 = sadd.s32 %s101, 1
      %s103 = scalar_select %p100, %s101, %s102
      %p106 = pneg %p100
      %p107 = scmp.eq.s32.totalorder %s18, 1
      %p108 = por %p106, %p107
      %p109 = scmp.ne.s32.totalorder %s101, %s104
      %p110 = scmp.eq.s32.totalorder %s18, 0
      %p111 = por %p109, %p110
      %p112 = scmp.ne.s32.totalorder %s101, %s104
      %p113 = scmp.eq.s32.totalorder %s23, 1
      %p114 = por %p112, %p113
      %p115 = scmp.ne.s32.totalorder %s104, %s105
      %p116 = scmp.eq.s32.totalorder %s23, 0
      %p117 = por %p115, %p116
      %p118 = scmp.ne.s32.totalorder %s104, %s105
      %p119 = scmp.eq.s32.totalorder %s24, 1
      %p120 = por %p118, %p119
      %p122 = scmp.ne.s32.totalorder %s105, %s121
      %p123 = scmp.eq.s32.totalorder %s24, 0
      %p124 = por %p122, %p123
      %p125 = scmp.le.s32.totalorder 1, %s18
      %p126 = scmp.lt.s32.totalorder %s18, 3
      %p127 = pnand %p125, %p126
      %p128 = pneg %p127
      // Predicated region
      $region9: #{tpu_custom_call.1} parent=5 // pred_check
        _
      $region10: #{tpu_custom_call.1} parent=5 // pred_check_branch
        %130 = sbr.rel (%p127) target = $region12
      $region11: #{tpu_custom_call.1} parent=5 // pred_region
        %s131 = ssub.s32 %s18, 1
        // Predicated region
        $region13: #{tpu_custom_call.1} parent=11 // pred_check
          %p132 = pneg %p91
        $region14: #{tpu_custom_call.1} parent=11 // pred_check_branch
          %134 = sbr.rel (%p132) target = $region16
        $region15: #{tpu_custom_call.1} parent=11 // pred_region
          %s136 = ssub.s32 384, 384
          %137 = vsyncadd [#allocation6], %s136
          %s138 = sshll.u32 [#allocation7], 4
          %s139 = int_to_ptr.vmem [resolvable:$true] %s138
          %144 = dma.hbm_to_vmem [thread:$0]  %s2, 384, %s139, [#allocation6], 64, 64, 4
        $region16: #{tpu_custom_call.1} parent=11 // pred_fallthru
          _
      $region12: #{tpu_custom_call.1} parent=5 // pred_fallthru
        _
      %p145 = scmp.lt.s32.totalorder %s18, 2
      // Predicated region
      $region17: #{tpu_custom_call.1} parent=5 // pred_check
        %p146 = pneg %p145
      $region18: #{tpu_custom_call.1} parent=5 // pred_check_branch
        %148 = sbr.rel (%p146) target = $region20
      $region19: #{tpu_custom_call.1} parent=5 // pred_region
        // Predicated region
        $region21: #{tpu_custom_call.1} parent=19 // pred_check
          %p149 = pneg %p38
        $region22: #{tpu_custom_call.1} parent=19 // pred_check_branch
          %151 = sbr.rel (%p149) target = $region24
        $region23: #{tpu_custom_call.1} parent=19 // pred_region
          %s152 = sand.u32 %s28, 1
          %s153 = scalar_lea.sflag [#allocation3], %s152
          %s154 = sand.u32 %s28, 1
          %s155 = smul.addr %s154, 16
          %s156 = scalar_lea.vmem [#allocation2], %s155
          %s157 = smul.u32 2, %s18
          %s159 = ssub.s32 256, 256
          %160 = vsyncadd %s153, %s159
          %s161 = smul.addr %s157, 2
          %s162 = smul.addr %s161, 64
          %s163 = scalar_lea.hbm %s0, %s162
          %s164 = sshll.u32 %s156, 4
          %s165 = int_to_ptr.vmem [resolvable:$true] %s164
          %170 = dma.hbm_to_vmem [thread:$0]  %s163, 256, %s165, %s153, 64, 64, 4
        $region24: #{tpu_custom_call.1} parent=19 // pred_fallthru
          _
        // Predicated region
        $region25: #{tpu_custom_call.1} parent=19 // pred_check
          %p171 = pneg %p64
        $region26: #{tpu_custom_call.1} parent=19 // pred_check_branch
          %173 = sbr.rel (%p171) target = $region28
        $region27: #{tpu_custom_call.1} parent=19 // pred_region
          %s174 = sand.u32 %s18, 1
          %s175 = scalar_lea.sflag [#allocation6], %s174
          %s176 = sand.u32 %s54, 1
          %s177 = smul.addr %s176, 8
          %s178 = scalar_lea.vmem [#allocation5], %s177
          %s179 = smul.u32 2, %s18
          %s181 = ssub.s32 128, 128
          %182 = vsyncadd %s175, %s181
          %s183 = smul.addr %s179, 2
          %s184 = smul.addr %s183, 32
          %s185 = scalar_lea.hbm %s1, %s184
          %s186 = sshll.u32 %s178, 4
          %s187 = int_to_ptr.vmem [resolvable:$true] %s186
          %192 = dma.hbm_to_vmem [thread:$0]  %s185, 128, %s187, %s175, 32, 32, 2
        $region28: #{tpu_custom_call.1} parent=19 // pred_fallthru
          _
      $region20: #{tpu_custom_call.1} parent=5 // pred_fallthru
        _
      %p193 = scmp.le.s32.totalorder 1, %s18
      %p194 = scmp.lt.s32.totalorder %s18, 3
      %p195 = pnand %p193, %p194
      %p196 = pneg %p195
      // Predicated region
      $region29: #{tpu_custom_call.1} parent=5 // pred_check
        _
      $region30: #{tpu_custom_call.1} parent=5 // pred_check_branch
        %198 = sbr.rel (%p195) target = $region32
      $region31: #{tpu_custom_call.1} parent=5 // pred_region
        %s199 = ssub.s32 %s18, 1
        %s200 = sand.u32 %s31, 1
        %s201 = scalar_lea.sflag [#allocation3], %s200
        %s202 = sand.u32 %s31, 1
        %s203 = smul.addr %s202, 16
        %s204 = scalar_lea.vmem [#allocation2], %s203
        // Predicated region
        $region33: #{tpu_custom_call.1} parent=31 // pred_check
          %p205 = pneg %p44
        $region34: #{tpu_custom_call.1} parent=31 // pred_check_branch
          %207 = sbr.rel (%p205) target = $region36
        $region35: #{tpu_custom_call.1} parent=31 // pred_region
          %208 = dma.done %s201, 256
        $region36: #{tpu_custom_call.1} parent=31 // pred_fallthru
          _
        %s209 = sand.u32 %s23, 1
        %s210 = scalar_lea.sflag [#allocation6], %s209
        %s211 = sand.u32 %s57, 1
        %s212 = smul.addr %s211, 8
        %s213 = scalar_lea.vmem [#allocation5], %s212
        // Predicated region
        $region37: #{tpu_custom_call.1} parent=31 // pred_check
          %p214 = pneg %p70
        $region38: #{tpu_custom_call.1} parent=31 // pred_check_branch
          %216 = sbr.rel (%p214) target = $region40
        $region39: #{tpu_custom_call.1} parent=31 // pred_region
          %217 = dma.done %s210, 128
        $region40: #{tpu_custom_call.1} parent=31 // pred_fallthru
          _
        // Predicated region
        $region41: #{tpu_custom_call.1} parent=31 // pred_check
          %p218 = pneg %p91
        $region42: #{tpu_custom_call.1} parent=31 // pred_check_branch
          %220 = sbr.rel (%p218) target = $region44
        $region43: #{tpu_custom_call.1} parent=31 // pred_region
          %221 = dma.done [#allocation6], 384
        $region44: #{tpu_custom_call.1} parent=31 // pred_fallthru
          _
        %s222 = sand.u32 %s31, 1
        %s223 = scalar_lea.sflag [#allocation3], %s222
        %s224 = sand.u32 %s31, 1
        %s225 = smul.addr %s224, 16
        %s226 = scalar_lea.vmem [#allocation2], %s225
        %p227 = pneg %p44
        %p228 = pneg %p41
        %s229 = sand.u32 %s23, 1
        %s230 = scalar_lea.sflag [#allocation6], %s229
        %s231 = sand.u32 %s57, 1
        %s232 = smul.addr %s231, 8
        %s233 = scalar_lea.vmem [#allocation5], %s232
        %p234 = pneg %p70
        %p235 = pneg %p67
        %p236 = pneg %p91
        %p237 = pneg %p88
        %p238 = pneg %p117
        %p239 = pneg %p114
        %s240 = sand.u32 %s104, 1
        %s241 = scalar_lea.sflag [#allocation4], %s240
        %s242 = sand.u32 %s104, 1
        %s243 = smul.addr %s242, 16
        %s244 = scalar_lea.vmem [#allocation8], %s243
        %s245 = smul.u32 2, %s23
        %s246 = smul.u32 2, %s23
        %s247 = smul.u32 2, %s23
        %s249 = scalar_lea.vmem [#allocation7], 8
        %v250 = vld [vmem:[%s249] sm:$0xf]
        %v251 = vld [vmem:[%s249 + $0x4] sm:$0xf]
        %v252 = vld [vmem:[#allocation7] sm:$0xf]
        %v253 = vld [vmem:[#allocation7 + $0x4] sm:$0xf]
        %s254 = scalar_lea.vmem [#allocation7], 16
        %v255 = vld [vmem:[%s254] sm:$0xf]
        %v256 = vld [vmem:[%s254 + $0x4] sm:$0xf]
        %v257 = vlaneseq
        %v258 = vand.u32 %v257, 127
        %vm259 = vcmp.ge.s32.totalorder %v258, 2
        %v260 = vsel %vm259, 1, 0
        %v261 = vcvt.s32.f32 %v260
        %vm262 = vcmp.lt.s32.totalorder %v258, 126
        %v263 = vsel %vm262, 1, 0
        %v264 = vcvt.s32.f32 %v263
        %v265 = vld [vmem:[%s204] sm:$0xf]
        %v266 = vld [vmem:[%s204 + $0x4] sm:$0xf]
        %v267 = vunpack.c.l.bf16 %v265
        %v268 = vunpack.c.l.bf16 %v266
        %v269 = vld [vmem:[%s213] sm:$0x3]
        %v270 = vld [vmem:[%s213 + $0x2] sm:$0x3]
        %v271 = vunpack.c.0.s8 %v269
        %v272 = vunpack.c.0.s8 %v270
        %v273 = vcvt.s32.f32 %v271
        %v274 = vcvt.s32.f32 %v272
        %v275 = vmul.f32 %v267, %v273
        %v276 = vmul.f32 %v268, %v274
        %v277 = vpack.c.bf16 %v276, %v275
        %278 = vrot.lane.b32.xlu0 %v275, 2
        %v279 = vpop.permute.xlu0 %278
        %280 = vrot.lane.b32.xlu0 %v276, 2
        %v281 = vpop.permute.xlu0 %280
        %v282 = vmul.f32 %v279, %v261
        %v283 = vmul.f32 %v281, %v261
        %284 = vrot.lane.b32.xlu0 %v275, 126
        %v285 = vpop.permute.xlu0 %284
        %286 = vrot.lane.b32.xlu0 %v276, 126
        %v287 = vpop.permute.xlu0 %286
        %v288 = vmul.f32 %v285, %v264
        %v289 = vmul.f32 %v287, %v264
        %v290 = vpack.c.bf16 %v283, %v282
        %v293 = vunpack.c.l.b16 %v252
        %v294 = vunpack.c.l.b16 %v253
        %v295 = vpack.c.b16 %v294, %v293
        %vm296 = vcmask 130048
        %v298 = vsel %vm296, %v295, 0
        %300 = vmatprep.subr.bf16.mxu0 0
        %301 = vmatpush1.bf16.msra.mxu0 %v290
        %302 = vmatprep.subr.bf16.mxu0 0
        %303 = vmatpush1.bf16.msra.mxu0 0
        %304 = vmatprep.subr.bf16.mxu0 0
        %305 = vmatpush1.bf16.msra.mxu0 0
        %306 = vmatprep.subr.bf16.mxu0 0
        %307 = vmatpush1.bf16.msra.mxu0 0
        %308 = vmatprep.subr.bf16.mxu0 0
        %309 = vmatpush1.bf16.msra.mxu0 0
        %310 = vmatprep.subr.bf16.mxu0 0
        %311 = vmatpush1.bf16.msra.mxu0 0
        %312 = vmatprep.subr.bf16.mxu0 0
        %313 = vmatpush1.bf16.msra.mxu0 0
        %314 = vmatprep.subr.bf16.mxu0 0
        %315 = vmatpush1.bf16.msra.mxu0 0
        %316 = vmatprep.subr.bf16.mxu0 0
        %317 = vmatpush1.bf16.msra.mxu0 0
        %318 = vmatprep.subr.bf16.mxu0 0
        %319 = vmatpush1.bf16.msra.mxu0 0
        %320 = vmatprep.subr.bf16.mxu0 0
        %321 = vmatpush1.bf16.msra.mxu0 0
        %322 = vmatprep.subr.bf16.mxu0 0
        %323 = vmatpush1.bf16.msra.mxu0 0
        %324 = vmatprep.subr.bf16.mxu0 0
        %325 = vmatpush1.bf16.msra.mxu0 0
        %326 = vmatprep.subr.bf16.mxu0 0
        %327 = vmatpush1.bf16.msra.mxu0 0
        %328 = vmatprep.subr.bf16.mxu0 0
        %329 = vmatpush1.bf16.msra.mxu0 0
        %330 = vmatprep.subr.bf16.mxu0 0
        %331 = vmatpush1.bf16.msra.mxu0 0
        %332 = vmatprep.mubr.bf16.mxu0 0
        %333 = vmatmul.mubr.bf16.gmra.mrb[0].mxu0 %v298
        %v334 = vpop.f32.mrb[0].mxu0
        %v335 = vadd.f32 0.0, %v334
        %v336 = vpop.f32.mrb[0].mxu0
        %v337 = vpop.f32.mrb[0].mxu0
        %v338 = vadd.f32 0.0, %v337
        %v339 = vpop.f32.mrb[0].mxu0
        %340 = vdwg.mxu0
        %v343 = vunpack.c.l.b16 %v250
        %v344 = vunpack.c.l.b16 %v251
        %v345 = vpack.c.b16 %v344, %v343
        %v347 = vsel %vm296, %v345, 0
        %349 = vmatprep.subr.bf16.mxu0 0
        %350 = vmatpush1.bf16.msra.mxu0 %v277
        %351 = vmatprep.subr.bf16.mxu0 0
        %352 = vmatpush1.bf16.msra.mxu0 0
        %353 = vmatprep.subr.bf16.mxu0 0
        %354 = vmatpush1.bf16.msra.mxu0 0
        %355 = vmatprep.subr.bf16.mxu0 0
        %356 = vmatpush1.bf16.msra.mxu0 0
        %357 = vmatprep.subr.bf16.mxu0 0
        %358 = vmatpush1.bf16.msra.mxu0 0
        %359 = vmatprep.subr.bf16.mxu0 0
        %360 = vmatpush1.bf16.msra.mxu0 0
        %361 = vmatprep.subr.bf16.mxu0 0
        %362 = vmatpush1.bf16.msra.mxu0 0
        %363 = vmatprep.subr.bf16.mxu0 0
        %364 = vmatpush1.bf16.msra.mxu0 0
        %365 = vmatprep.subr.bf16.mxu0 0
        %366 = vmatpush1.bf16.msra.mxu0 0
        %367 = vmatprep.subr.bf16.mxu0 0
        %368 = vmatpush1.bf16.msra.mxu0 0
        %369 = vmatprep.subr.bf16.mxu0 0
        %370 = vmatpush1.bf16.msra.mxu0 0
        %371 = vmatprep.subr.bf16.mxu0 0
        %372 = vmatpush1.bf16.msra.mxu0 0
        %373 = vmatprep.subr.bf16.mxu0 0
        %374 = vmatpush1.bf16.msra.mxu0 0
        %375 = vmatprep.subr.bf16.mxu0 0
        %376 = vmatpush1.bf16.msra.mxu0 0
        %377 = vmatprep.subr.bf16.mxu0 0
        %378 = vmatpush1.bf16.msra.mxu0 0
        %379 = vmatprep.subr.bf16.mxu0 0
        %380 = vmatpush1.bf16.msra.mxu0 0
        %381 = vmatprep.mubr.bf16.mxu0 0
        %382 = vmatmul.mubr.bf16.gmra.mrb[0].mxu0 %v347
        %v383 = vpop.f32.mrb[0].mxu0
        %v384 = vadd.f32 %v335, %v383
        %v385 = vpop.f32.mrb[0].mxu0
        %v386 = vpop.f32.mrb[0].mxu0
        %v387 = vadd.f32 %v338, %v386
        %v388 = vpop.f32.mrb[0].mxu0
        %389 = vdwg.mxu0
        %v390 = vpack.c.bf16 %v289, %v288
        %v393 = vunpack.c.l.b16 %v255
        %v394 = vunpack.c.l.b16 %v256
        %v395 = vpack.c.b16 %v394, %v393
        %v397 = vsel %vm296, %v395, 0
        %399 = vmatprep.subr.bf16.mxu0 0
        %400 = vmatpush1.bf16.msra.mxu0 %v390
        %401 = vmatprep.subr.bf16.mxu0 0
        %402 = vmatpush1.bf16.msra.mxu0 0
        %403 = vmatprep.subr.bf16.mxu0 0
        %404 = vmatpush1.bf16.msra.mxu0 0
        %405 = vmatprep.subr.bf16.mxu0 0
        %406 = vmatpush1.bf16.msra.mxu0 0
        %407 = vmatprep.subr.bf16.mxu0 0
        %408 = vmatpush1.bf16.msra.mxu0 0
        %409 = vmatprep.subr.bf16.mxu0 0
        %410 = vmatpush1.bf16.msra.mxu0 0
        %411 = vmatprep.subr.bf16.mxu0 0
        %412 = vmatpush1.bf16.msra.mxu0 0
        %413 = vmatprep.subr.bf16.mxu0 0
        %414 = vmatpush1.bf16.msra.mxu0 0
        %415 = vmatprep.subr.bf16.mxu0 0
        %416 = vmatpush1.bf16.msra.mxu0 0
        %417 = vmatprep.subr.bf16.mxu0 0
        %418 = vmatpush1.bf16.msra.mxu0 0
        %419 = vmatprep.subr.bf16.mxu0 0
        %420 = vmatpush1.bf16.msra.mxu0 0
        %421 = vmatprep.subr.bf16.mxu0 0
        %422 = vmatpush1.bf16.msra.mxu0 0
        %423 = vmatprep.subr.bf16.mxu0 0
        %424 = vmatpush1.bf16.msra.mxu0 0
        %425 = vmatprep.subr.bf16.mxu0 0
        %426 = vmatpush1.bf16.msra.mxu0 0
        %427 = vmatprep.subr.bf16.mxu0 0
        %428 = vmatpush1.bf16.msra.mxu0 0
        %429 = vmatprep.subr.bf16.mxu0 0
        %430 = vmatpush1.bf16.msra.mxu0 0
        %431 = vmatprep.mubr.bf16.mxu0 0
        %432 = vmatmul.mubr.bf16.gmra.mrb[0].mxu0 %v397
        %v433 = vpop.f32.mrb[0].mxu0
        %v434 = vadd.f32 0.0, %v433
        %v435 = vpop.f32.mrb[0].mxu0
        %v436 = vpop.f32.mrb[0].mxu0
        %v437 = vadd.f32 0.0, %v436
        %v438 = vpop.f32.mrb[0].mxu0
        %439 = vdwg.mxu0
        %v440 = vadd.f32 %v384, %v434
        %v441 = vadd.f32 %v387, %v437
        %v442 = vadd.f32 %v440, %v267
        %v443 = vadd.f32 %v441, %v268
        %vm444 = vcmp.ge.f32.partialorder %v442, 0.0
        %vm445 = vcmp.ge.f32.partialorder %v443, 0.0
        %v446 = vmul.f32 %v442, 0.2
        %v447 = vmul.f32 %v443, 0.2
        %v448 = vsel %vm444, %v442, %v446
        %v449 = vsel %vm445, %v443, %v447
        %v450 = vpack.c.bf16 %v449, %v448
        %v452 = vunpack.c.l.b16 %v450
        %v453 = vunpack.c.h.b16 %v450
        %v454 = vpack.c.b16 %v452, %v452
        %v455 = vpack.c.b16 %v453, %v453
        %458 = vst [vmem:[%s244] sm:$0xf] %v454
        %459 = vst [vmem:[%s244 + $0x4] sm:$0xf] %v455
        %s460 = scalar_lea.vmem %s204, 8 [#allocation2]
        %v461 = vld [vmem:[%s460] sm:$0xf]
        %v462 = vld [vmem:[%s460 + $0x4] sm:$0xf]
        %v463 = vunpack.c.l.bf16 %v461
        %v464 = vunpack.c.l.bf16 %v462
        %s465 = scalar_lea.vmem %s213, 4 [#allocation5]
        %v466 = vld [vmem:[%s465] sm:$0x3]
        %v467 = vld [vmem:[%s465 + $0x2] sm:$0x3]
        %v468 = vunpack.c.0.s8 %v466
        %v469 = vunpack.c.0.s8 %v467
        %v470 = vcvt.s32.f32 %v468
        %v471 = vcvt.s32.f32 %v469
        %v472 = vmul.f32 %v463, %v470
        %v473 = vmul.f32 %v464, %v471
        %v474 = vpack.c.bf16 %v473, %v472
        %475 = vrot.lane.b32.xlu0 %v472, 2
        %v476 = vpop.permute.xlu0 %475
        %477 = vrot.lane.b32.xlu0 %v473, 2
        %v478 = vpop.permute.xlu0 %477
        %v479 = vmul.f32 %v476, %v261
        %v480 = vmul.f32 %v478, %v261
        %481 = vrot.lane.b32.xlu0 %v472, 126
        %v482 = vpop.permute.xlu0 %481
        %483 = vrot.lane.b32.xlu0 %v473, 126
        %v484 = vpop.permute.xlu0 %483
        %v485 = vmul.f32 %v482, %v264
        %v486 = vmul.f32 %v484, %v264
        %v487 = vpack.c.bf16 %v480, %v479
        %488 = vmatprep.subr.bf16.mxu0 0
        %489 = vmatpush1.bf16.msra.mxu0 %v487
        %490 = vmatprep.subr.bf16.mxu0 0
        %491 = vmatpush1.bf16.msra.mxu0 0
        %492 = vmatprep.subr.bf16.mxu0 0
        %493 = vmatpush1.bf16.msra.mxu0 0
        %494 = vmatprep.subr.bf16.mxu0 0
        %495 = vmatpush1.bf16.msra.mxu0 0
        %496 = vmatprep.subr.bf16.mxu0 0
        %497 = vmatpush1.bf16.msra.mxu0 0
        %498 = vmatprep.subr.bf16.mxu0 0
        %499 = vmatpush1.bf16.msra.mxu0 0
        %500 = vmatprep.subr.bf16.mxu0 0
        %501 = vmatpush1.bf16.msra.mxu0 0
        %502 = vmatprep.subr.bf16.mxu0 0
        %503 = vmatpush1.bf16.msra.mxu0 0
        %504 = vmatprep.subr.bf16.mxu0 0
        %505 = vmatpush1.bf16.msra.mxu0 0
        %506 = vmatprep.subr.bf16.mxu0 0
        %507 = vmatpush1.bf16.msra.mxu0 0
        %508 = vmatprep.subr.bf16.mxu0 0
        %509 = vmatpush1.bf16.msra.mxu0 0
        %510 = vmatprep.subr.bf16.mxu0 0
        %511 = vmatpush1.bf16.msra.mxu0 0
        %512 = vmatprep.subr.bf16.mxu0 0
        %513 = vmatpush1.bf16.msra.mxu0 0
        %514 = vmatprep.subr.bf16.mxu0 0
        %515 = vmatpush1.bf16.msra.mxu0 0
        %516 = vmatprep.subr.bf16.mxu0 0
        %517 = vmatpush1.bf16.msra.mxu0 0
        %518 = vmatprep.subr.bf16.mxu0 0
        %519 = vmatpush1.bf16.msra.mxu0 0
        %520 = vmatprep.mubr.bf16.mxu0 0
        %521 = vmatmul.mubr.bf16.gmra.mrb[0].mxu0 %v298
        %v522 = vpop.f32.mrb[0].mxu0
        %v523 = vadd.f32 0.0, %v522
        %v524 = vpop.f32.mrb[0].mxu0
        %v525 = vpop.f32.mrb[0].mxu0
        %v526 = vadd.f32 0.0, %v525
        %v527 = vpop.f32.mrb[0].mxu0
        %528 = vdwg.mxu0
        %529 = vmatprep.subr.bf16.mxu0 0
        %530 = vmatpush1.bf16.msra.mxu0 %v474
        %531 = vmatprep.subr.bf16.mxu0 0
        %532 = vmatpush1.bf16.msra.mxu0 0
        %533 = vmatprep.subr.bf16.mxu0 0
        %534 = vmatpush1.bf16.msra.mxu0 0
        %535 = vmatprep.subr.bf16.mxu0 0
        %536 = vmatpush1.bf16.msra.mxu0 0
        %537 = vmatprep.subr.bf16.mxu0 0
        %538 = vmatpush1.bf16.msra.mxu0 0
        %539 = vmatprep.subr.bf16.mxu0 0
        %540 = vmatpush1.bf16.msra.mxu0 0
        %541 = vmatprep.subr.bf16.mxu0 0
        %542 = vmatpush1.bf16.msra.mxu0 0
        %543 = vmatprep.subr.bf16.mxu0 0
        %544 = vmatpush1.bf16.msra.mxu0 0
        %545 = vmatprep.subr.bf16.mxu0 0
        %546 = vmatpush1.bf16.msra.mxu0 0
        %547 = vmatprep.subr.bf16.mxu0 0
        %548 = vmatpush1.bf16.msra.mxu0 0
        %549 = vmatprep.subr.bf16.mxu0 0
        %550 = vmatpush1.bf16.msra.mxu0 0
        %551 = vmatprep.subr.bf16.mxu0 0
        %552 = vmatpush1.bf16.msra.mxu0 0
        %553 = vmatprep.subr.bf16.mxu0 0
        %554 = vmatpush1.bf16.msra.mxu0 0
        %555 = vmatprep.subr.bf16.mxu0 0
        %556 = vmatpush1.bf16.msra.mxu0 0
        %557 = vmatprep.subr.bf16.mxu0 0
        %558 = vmatpush1.bf16.msra.mxu0 0
        %559 = vmatprep.subr.bf16.mxu0 0
        %560 = vmatpush1.bf16.msra.mxu0 0
        %561 = vmatprep.mubr.bf16.mxu0 0
        %562 = vmatmul.mubr.bf16.gmra.mrb[0].mxu0 %v347
        %v563 = vpop.f32.mrb[0].mxu0
        %v564 = vadd.f32 %v523, %v563
        %v565 = vpop.f32.mrb[0].mxu0
        %v566 = vpop.f32.mrb[0].mxu0
        %v567 = vadd.f32 %v526, %v566
        %v568 = vpop.f32.mrb[0].mxu0
        %569 = vdwg.mxu0
        %v570 = vpack.c.bf16 %v486, %v485
        %571 = vmatprep.subr.bf16.mxu0 0
        %572 = vmatpush1.bf16.msra.mxu0 %v570
        %573 = vmatprep.subr.bf16.mxu0 0
        %574 = vmatpush1.bf16.msra.mxu0 0
        %575 = vmatprep.subr.bf16.mxu0 0
        %576 = vmatpush1.bf16.msra.mxu0 0
        %577 = vmatprep.subr.bf16.mxu0 0
        %578 = vmatpush1.bf16.msra.mxu0 0
        %579 = vmatprep.subr.bf16.mxu0 0
        %580 = vmatpush1.bf16.msra.mxu0 0
        %581 = vmatprep.subr.bf16.mxu0 0
        %582 = vmatpush1.bf16.msra.mxu0 0
        %583 = vmatprep.subr.bf16.mxu0 0
        %584 = vmatpush1.bf16.msra.mxu0 0
        %585 = vmatprep.subr.bf16.mxu0 0
        %586 = vmatpush1.bf16.msra.mxu0 0
        %587 = vmatprep.subr.bf16.mxu0 0
        %588 = vmatpush1.bf16.msra.mxu0 0
        %589 = vmatprep.subr.bf16.mxu0 0
        %590 = vmatpush1.bf16.msra.mxu0 0
        %591 = vmatprep.subr.bf16.mxu0 0
        %592 = vmatpush1.bf16.msra.mxu0 0
        %593 = vmatprep.subr.bf16.mxu0 0
        %594 = vmatpush1.bf16.msra.mxu0 0
        %595 = vmatprep.subr.bf16.mxu0 0
        %596 = vmatpush1.bf16.msra.mxu0 0
        %597 = vmatprep.subr.bf16.mxu0 0
        %598 = vmatpush1.bf16.msra.mxu0 0
        %599 = vmatprep.subr.bf16.mxu0 0
        %600 = vmatpush1.bf16.msra.mxu0 0
        %601 = vmatprep.subr.bf16.mxu0 0
        %602 = vmatpush1.bf16.msra.mxu0 0
        %603 = vmatprep.mubr.bf16.mxu0 0
        %604 = vmatmul.mubr.bf16.gmra.mrb[0].mxu0 %v397
        %v605 = vpop.f32.mrb[0].mxu0
        %v606 = vadd.f32 0.0, %v605
        %v607 = vpop.f32.mrb[0].mxu0
        %v608 = vpop.f32.mrb[0].mxu0
        %v609 = vadd.f32 0.0, %v608
        %v610 = vpop.f32.mrb[0].mxu0
        %611 = vdwg.mxu0
        %v612 = vadd.f32 %v564, %v606
        %v613 = vadd.f32 %v567, %v609
        %v614 = vadd.f32 %v612, %v463
        %v615 = vadd.f32 %v613, %v464
        %vm616 = vcmp.ge.f32.partialorder %v614, 0.0
        %vm617 = vcmp.ge.f32.partialorder %v615, 0.0
        %v618 = vmul.f32 %v614, 0.2
        %v619 = vmul.f32 %v615, 0.2
        %v620 = vsel %vm616, %v614, %v618
        %v621 = vsel %vm617, %v615, %v619
        %v622 = vpack.c.bf16 %v621, %v620
        %v624 = vunpack.c.l.b16 %v622
        %v625 = vunpack.c.h.b16 %v622
        %v626 = vpack.c.b16 %v624, %v624
        %v627 = vpack.c.b16 %v625, %v625
        %s630 = scalar_lea.vmem %s244, 8 [#allocation8]
        %631 = vst [vmem:[%s630] sm:$0xf] %v626
        %632 = vst [vmem:[%s630 + $0x4] sm:$0xf] %v627
        %s633 = sand.u32 %s104, 1
        %s634 = scalar_lea.sflag [#allocation4], %s633
        %s635 = sand.u32 %s104, 1
        %s636 = smul.addr %s635, 16
        %s637 = scalar_lea.vmem [#allocation8], %s636
        // Predicated region
        $region45: #{tpu_custom_call.1} parent=31 // pred_check
          %p638 = pneg %p114
        $region46: #{tpu_custom_call.1} parent=31 // pred_check_branch
          %640 = sbr.rel (%p638) target = $region48
        $region47: #{tpu_custom_call.1} parent=31 // pred_region
          %s641 = smul.u32 2, %s23
          %s643 = ssub.s32 256, 256
          %644 = vsyncadd %s634, %s643
          %s645 = smul.addr %s641, 2
          %s646 = smul.addr %s645, 64
          %s647 = scalar_lea.hbm %s3, %s646
          %s648 = sshll.u32 %s637, 4
          %s649 = int_to_ptr.vmem [resolvable:$true] %s648
          %654 = dma.vmem_to_hbm [thread:$0]  %s649, 256, %s647, %s634, 64, 64, 4
        $region48: #{tpu_custom_call.1} parent=31 // pred_fallthru
          _
      $region32: #{tpu_custom_call.1} parent=5 // pred_fallthru
        _
      %p655 = scmp.le.s32.totalorder 2, %s18
      // Predicated region
      $region49: #{tpu_custom_call.1} parent=5 // pred_check
        %p656 = pneg %p655
      $region50: #{tpu_custom_call.1} parent=5 // pred_check_branch
        %658 = sbr.rel (%p656) target = $region52
      $region51: #{tpu_custom_call.1} parent=5 // pred_region
        %s659 = ssub.s32 %s18, 2
        // Predicated region
        $region53: #{tpu_custom_call.1} parent=51 // pred_check
          %p660 = pneg %p120
        $region54: #{tpu_custom_call.1} parent=51 // pred_check_branch
          %662 = sbr.rel (%p660) target = $region56
        $region55: #{tpu_custom_call.1} parent=51 // pred_region
          %s663 = sand.u32 %s105, 1
          %s664 = scalar_lea.sflag [#allocation4], %s663
          %s665 = sand.u32 %s105, 1
          %s666 = smul.addr %s665, 16
          %s667 = scalar_lea.vmem [#allocation8], %s666
          %668 = dma.done %s664, 256
        $region56: #{tpu_custom_call.1} parent=51 // pred_fallthru
          _
      $region52: #{tpu_custom_call.1} parent=5 // pred_fallthru
        _
    $region6: #{tpu_custom_call.1} parent=1 // loop_footer
      %s22 = sadd.s32 1, %s18
    $region7: #{tpu_custom_call.1} parent=1 // loop_footer_branch
      %17 = sbr.rel target = $region3
    $region8: #{tpu_custom_call.1} parent=1 // loop_exit
      _
    %669 = vsyncpa [#allocation3], 1
    %s670 = scalar_lea.sflag [#allocation3], 1
    %671 = vsyncpa %s670, 1
    %672 = vsyncpa [#allocation6], 1
    %s673 = scalar_lea.sflag [#allocation6], 1
    %674 = vsyncpa %s673, 1
    %675 = vsyncpa [#allocation4], 1
    %s676 = scalar_lea.sflag [#allocation4], 1
    %677 = vsyncpa %s676, 1

</llo_original>
